<compile_context>
chip_gen: v7x
topology: tpu7x:2x2x1
jax: 0.10.0
libtpu: 0.0.40
codegen_flags: <defaults>
</compile_context>

<pallas_src>
import math
import functools

import jax
import jax.numpy as jnp
from jax.experimental import pallas as pl
from jax.experimental.pallas import tpu as pltpu


def _rmsnorm_kernel(x_ref, g_ref, o_ref, *, eps, d_model):
    # x_ref: (tm, D)   g_ref: (1, D)   o_ref: (tm, D)
    x = x_ref[...].astype(jnp.float32)
    mean_sq = jnp.sum(x * x, axis=-1, keepdims=True) * (1.0 / d_model)
    inv_rms = jax.lax.rsqrt(mean_sq + eps)            # EUP transcendental (free slot)
    g = g_ref[...].astype(jnp.float32)                # (1, D) broadcasts over rows
    o_ref[...] = (x * inv_rms * g).astype(o_ref.dtype)


def rmsnorm_forward(x, gain, *, eps=1e-5, tm=None):
    """RMSNorm over the last dim. x: (..., D), gain: (D,) -> same shape as x."""
    *lead, D = x.shape
    assert gain.shape == (D,), "gain must have shape (d_model,)"
    M = int(math.prod(lead)) if lead else 1
    x2d = x.reshape(M, D)
    g2d = gain.reshape(1, D)

    in_bytes = jnp.dtype(x.dtype).itemsize
    # Dtype-aware sublane multiple: f32 -> 8, bf16/f16 -> 16, int8/fp8 -> 32.
    sub = max(8, 32 // max(1, in_bytes))

    if tm is None:
        # ~4 MiB per x block: amortizes per-step overhead and sits near the HBM
        # roofline, while 2x(in) + 2x(out) double buffers plus f32 upcast
        # temporaries stay far below v7x's 64 MiB VMEM (and v5e/v6e's 128 MiB).
        target_bytes = 4 << 20
        tm = max(sub, target_bytes // max(1, D * in_bytes))
        # Keep the row grid at >= ~8 steps when M allows: amortizes the
        # ~0.35us/step cost and gives both v7x TensorCores work.
        steps_cap = pl.cdiv(M, 8)
        tm = min(tm, pl.cdiv(steps_cap, sub) * sub)
        tm = min(tm, 8192)
    tm = max(sub, (tm // sub) * sub)
    if tm >= M:
        tm = M  # single full-extent block (legal for any M, no divisibility rule)

    grid = (pl.cdiv(M, tm),)
    kernel = functools.partial(_rmsnorm_kernel, eps=float(eps), d_model=D)

    # NOTE: if D is not a multiple of 128, the output block is lane-ragged;
    # typical model dims are 128-aligned so we keep D whole (full-extent last
    # dim is always a legal block) rather than paying an extra HBM pad pass.
    out2d = pl.pallas_call(
        kernel,
        out_shape=jax.ShapeDtypeStruct((M, D), x.dtype),
        grid_spec=pltpu.PrefetchScalarGridSpec(
            num_scalar_prefetch=0,
            grid=grid,
            in_specs=[
                pl.BlockSpec((tm, D), lambda i: (i, 0)),   # x row-tile
                pl.BlockSpec((1, D), lambda i: (0, 0)),    # gain (resident)
            ],
            out_specs=pl.BlockSpec((tm, D), lambda i: (i, 0)),
        ),
        compiler_params=pltpu.CompilerParams(
            dimension_semantics=("parallel",),   # shard rows across v7x's 2 TCs
            vmem_limit_bytes=64 << 20,           # above v5e(16)/v7x(32) MiB scoped defaults
        ),
        cost_estimate=pl.CostEstimate(
            flops=4 * M * D,                     # square, sum, scale, gain-mul
            transcendentals=M,                   # one rsqrt per row
            bytes_accessed=2 * M * D * in_bytes
            + D * jnp.dtype(gain.dtype).itemsize,
        ),
    )(x2d, g2d)

    return out2d.reshape(*lead, D)


if __name__ == "__main__":
    batch, seq, d_model = 2, 8, 32
    eps = 1e-5

    key = jax.random.PRNGKey(0)
    kx, kg = jax.random.split(key)
    x = jax.random.normal(kx, (batch, seq, d_model), dtype=jnp.float32)
    # PyTorch module initializes gain to ones; perturb slightly so the gain
    # multiplication is actually exercised by the correctness check.
    gain = jnp.ones((d_model,), dtype=jnp.float32) + 0.1 * jax.random.normal(
        kg, (d_model,), dtype=jnp.float32
    )

    y = rmsnorm_forward(x, gain, eps=eps)
    y = jax.block_until_ready(y)

    # Reference: exactly the PyTorch forward semantics (f32 compute, cast back).
    xf = x.astype(jnp.float32)
    rms = jnp.sqrt(jnp.sum(xf * xf, axis=-1, keepdims=True) / d_model + eps)
    y_ref = (xf / rms * gain.reshape(1, 1, -1)).astype(x.dtype)

    assert y.shape == (batch, seq, d_model)
    assert jnp.allclose(y, y_ref, atol=1e-5, rtol=1e-5)

    print("KERNEL_OK")
</pallas_src>

<mosaic_0001>
module attributes {stable_mosaic.version = 11 : i64} {
  func.func @_rmsnorm_kernel(%arg0: i32, %arg1: memref<8x32xf32, #tpu.memory_space<vmem>>, %arg2: memref<1x32xf32, #tpu.memory_space<vmem>>, %arg3: memref<8x32xf32, #tpu.memory_space<vmem>>) attributes {dimension_semantics = [#tpu.dimension_semantics<parallel>], iteration_bounds = array<i64: 2>, scalar_prefetch = 0 : i64, scratch_operands = 0 : i64, tpu.core_type = #tpu.core_type<tc>, window_params = [{transform_indices = @transform_0, window_bounds = array<i64: 8, 32>}, {pipeline_mode = #tpu.pipeline_mode<synchronous>, transform_indices = @transform_1, window_bounds = array<i64: 1, 32>}, {transform_indices = @transform_2, window_bounds = array<i64: 8, 32>}]} {
    %c0 = arith.constant 0 : index
    %c0_0 = arith.constant 0 : index
    %0 = vector.load %arg1[%c0, %c0_0] : memref<8x32xf32, #tpu.memory_space<vmem>>, vector<8x32xf32>
    %1 = arith.mulf %0, %0 : vector<8x32xf32>
    %cst = arith.constant dense<0.000000e+00> : vector<8xf32>
    %2 = vector.multi_reduction <add>, %1, %cst [1] : vector<8x32xf32> to vector<8xf32>
    %3 = vector.shape_cast %2 : vector<8xf32> to vector<8x1xf32>
    %cst_1 = arith.constant 3.125000e-02 : f32
    %4 = vector.broadcast %cst_1 : f32 to vector<8x1xf32>
    %5 = arith.mulf %3, %4 : vector<8x1xf32>
    %cst_2 = arith.constant 9.99999974E-6 : f32
    %6 = vector.broadcast %cst_2 : f32 to vector<8x1xf32>
    %7 = arith.addf %5, %6 : vector<8x1xf32>
    %8 = math.rsqrt %7 : vector<8x1xf32>
    %c0_3 = arith.constant 0 : index
    %c0_4 = arith.constant 0 : index
    %9 = vector.load %arg2[%c0_3, %c0_4] : memref<1x32xf32, #tpu.memory_space<vmem>>, vector<1x32xf32>
    %10 = vector.broadcast %8 : vector<8x1xf32> to vector<8x32xf32>
    %11 = arith.mulf %0, %10 : vector<8x32xf32>
    %12 = vector.broadcast %9 : vector<1x32xf32> to vector<8x32xf32>
    %13 = arith.mulf %11, %12 : vector<8x32xf32>
    %c0_5 = arith.constant 0 : index
    %c0_6 = arith.constant 0 : index
    %14 = vector.load %arg3[%c0_5, %c0_6] : memref<8x32xf32, #tpu.memory_space<vmem>>, vector<8x32xf32>
    tpu.vector_store %arg3[%c0_5, %c0_6], %13 {strides = array<i32>} : memref<8x32xf32, #tpu.memory_space<vmem>>, vector<8x32xf32>,
    return
  }
  func.func @transform_0(%arg0: i32) -> (i32, i32) {
    %c0_i32 = arith.constant 0 : i32
    %c0_i32_0 = arith.constant 0 : i32
    return %arg0, %c0_i32 : i32, i32
  }
  func.func @transform_1(%arg0: i32) -> (i32, i32) {
    %c0_i32 = arith.constant 0 : i32
    %c0_i32_0 = arith.constant 0 : i32
    %c0_i32_1 = arith.constant 0 : i32
    return %c0_i32, %c0_i32_0 : i32, i32
  }
  func.func @transform_2(%arg0: i32) -> (i32, i32) {
    %c0_i32 = arith.constant 0 : i32
    %c0_i32_0 = arith.constant 0 : i32
    return %arg0, %c0_i32 : i32, i32
  }
}

</mosaic_0001>

<llo_original>
// kernel: tpu_custom_call.1
$region0: #{tpu_custom_call.1}
  #allocation0 [shape = 'u32[]', space=smem, size = 0x4, offset = 0x4, fixed_abs, tag = 'smem constant byte address 0x4 - core index']
  #allocation1 [shape = 'u32[144,128]{1,0:T(1,128)}', space=vmem, size = 0x12000, scoped, tag = 'internal scratch']
  %s0 = inlined_call_operand.hbm [shape: f32[16,32], index: 0, kind: input, shape index: {}]
  %s1 = inlined_call_operand.hbm [shape: f32[1,32], index: 1, kind: input, shape index: {}]
  %s2 = inlined_call_operand.hbm [shape: f32[16,32], index: 2, kind: output, shape index: {}]
  %s3 = sld [smem:[#allocation0]]
  $region49: #{tpu_custom_call.1} parent=0
    _
  %s5 = ssub.s32 1, %s3
  %s6 = scalar_select 0, %s5, %s3
  $region1: #{tpu_custom_call.1} parent=0
    #allocation2 [shape = 'u8[8192]{0}', space=vmem, size = 0x2000, scoped, tag = 'input window, operand 0']
    #allocation3 [shape = 's32[2]{0}', space=sflag, size = 0x8, scoped, tag = 'scoped memory for tpu_custom_call.1']
    #allocation4 [shape = 's32[2]{0}', space=sflag, size = 0x8, scoped, tag = 'scoped memory for tpu_custom_call.1']
    #allocation5 [shape = 'u8[512]{0}', space=vmem, size = 0x400, scoped, tag = 'input window, operand 1, single buffered']
    #allocation6 [shape = 's32[1]{0}', space=sflag, size = 0x4, scoped, tag = 'scoped memory for tpu_custom_call.1']
    #allocation7 [shape = 'u8[8192]{0}', space=vmem, size = 0x2000, scoped, tag = 'output window, operand 0']
    %7 = vsyncpa [#allocation3], 0
    %s8 = scalar_lea.sflag [#allocation3], 1
    %9 = vsyncpa %s8, 0
    %10 = vsyncpa [#allocation6], 0
    %11 = vsyncpa [#allocation4], 0
    %s12 = scalar_lea.sflag [#allocation4], 1
    %13 = vsyncpa %s12, 0
    loop: start=0, step=1, limit=4
    $region2: #{tpu_custom_call.1} parent=1 // loop_pre_header
      _
    $region3: #{tpu_custom_call.1} parent=1 // loop_header
      %s15 = sphi 0, %s19
      %p16 = scmp.ge.s32.totalorder %s15, 4
      %s25 = sphi 0, %s27
      %s28 = sphi 0, %s25
      %s29 = sphi 0, %s28
      %s45 = sphi 0, %s29
      %s49 = sphi 0, %s49
      %s51 = sphi 0, %s49
      %s52 = sphi 0, %s51
      %s66 = sphi 0, %s52
      %s72 = sphi 0, %s74
      %s75 = sphi 0, %s72
      %s76 = sphi 0, %s75
      %s92 = sphi 0, %s76
    $region4: #{tpu_custom_call.1} parent=1 // loop_header_branch
      %18 = sbr.rel (%p16) target = $region8
    $region5: #{tpu_custom_call.1} parent=1 // loop_body
      %s20 = ssub.s32 %s15, 1
      %s21 = ssub.s32 %s15, 2
      %s22 = sadd.s32 %s15, 1
      %s23 = ssub.s32 %s15, %s22
      %p24 = scmp.eq.s32.totalorder %s23, 0
      %s26 = sadd.s32 %s25, 1
      %s27 = scalar_select %p24, %s25, %s26
      %p30 = pneg %p24
      %p31 = scmp.eq.s32.totalorder %s15, 1
      %p32 = por %p30, %p31
      %p33 = scmp.ne.s32.totalorder %s25, %s28
      %p34 = scmp.eq.s32.totalorder %s15, 0
      %p35 = por %p33, %p34
      %p36 = scmp.ne.s32.totalorder %s25, %s28
      %p37 = scmp.eq.s32.totalorder %s20, 1
      %p38 = por %p36, %p37
      %p39 = scmp.ne.s32.totalorder %s28, %s29
      %p40 = scmp.eq.s32.totalorder %s20, 0
      %p41 = por %p39, %p40
      %p42 = scmp.ne.s32.totalorder %s28, %s29
      %p43 = scmp.eq.s32.totalorder %s21, 1
      %p44 = por %p42, %p43
      %p46 = scmp.ne.s32.totalorder %s29, %s45
      %p47 = scmp.eq.s32.totalorder %s21, 0
      %p48 = por %p46, %p47
      %s50 = sadd.s32 %s49, 1
      %p53 = scmp.eq.s32.totalorder %s15, 1
      %p54 = scmp.ne.s32.totalorder %s49, %s51
      %p55 = scmp.eq.s32.totalorder %s15, 0
      %p56 = por %p54, %p55
      %p57 = scmp.ne.s32.totalorder %s49, %s51
      %p58 = scmp.eq.s32.totalorder %s20, 1
      %p59 = por %p57, %p58
      %p60 = scmp.ne.s32.totalorder %s51, %s52
      %p61 = scmp.eq.s32.totalorder %s20, 0
      %p62 = por %p60, %p61
      %p63 = scmp.ne.s32.totalorder %s51, %s52
      %p64 = scmp.eq.s32.totalorder %s21, 1
      %p65 = por %p63, %p64
      %p67 = scmp.ne.s32.totalorder %s52, %s66
      %p68 = scmp.eq.s32.totalorder %s21, 0
      %p69 = por %p67, %p68
      %s70 = ssub.s32 %s15, %s22
      %p71 = scmp.eq.s32.totalorder %s70, 0
      %s73 = sadd.s32 %s72, 1
      %s74 = scalar_select %p71, %s72, %s73
      %p77 = pneg %p71
      %p78 = scmp.eq.s32.totalorder %s15, 1
      %p79 = por %p77, %p78
      %p80 = scmp.ne.s32.totalorder %s72, %s75
      %p81 = scmp.eq.s32.totalorder %s15, 0
      %p82 = por %p80, %p81
      %p83 = scmp.ne.s32.totalorder %s72, %s75
      %p84 = scmp.eq.s32.totalorder %s20, 1
      %p85 = por %p83, %p84
      %p86 = scmp.ne.s32.totalorder %s75, %s76
      %p87 = scmp.eq.s32.totalorder %s20, 0
      %p88 = por %p86, %p87
      %p89 = scmp.ne.s32.totalorder %s75, %s76
      %p90 = scmp.eq.s32.totalorder %s21, 1
      %p91 = por %p89, %p90
      %p93 = scmp.ne.s32.totalorder %s76, %s92
      %p94 = scmp.eq.s32.totalorder %s21, 0
      %p95 = por %p93, %p94
      %p96 = scmp.le.s32.totalorder 1, %s15
      %p97 = scmp.lt.s32.totalorder %s15, 3
      %p98 = pnand %p96, %p97
      %p99 = pneg %p98
      // Predicated region
      $region9: #{tpu_custom_call.1} parent=5 // pred_check
        _
      $region10: #{tpu_custom_call.1} parent=5 // pred_check_branch
        %101 = sbr.rel (%p98) target = $region12
      $region11: #{tpu_custom_call.1} parent=5 // pred_region
        %s102 = ssub.s32 %s15, 1
        // Predicated region
        $region13: #{tpu_custom_call.1} parent=11 // pred_check
          %p103 = pneg %p62
        $region14: #{tpu_custom_call.1} parent=11 // pred_check_branch
          %105 = sbr.rel (%p103) target = $region16
        $region15: #{tpu_custom_call.1} parent=11 // pred_region
          %s107 = ssub.s32 16, 16
          %108 = vsyncadd [#allocation6], %s107
          %s110 = sshll.u32 [#allocation5], 4
          %s111 = int_to_ptr.vmem [resolvable:$true] %s110
          %113 = dma.hbm_to_vmem [thread:$0]  %s1, 16, %s111, [#allocation6]
        $region16: #{tpu_custom_call.1} parent=11 // pred_fallthru
          _
      $region12: #{tpu_custom_call.1} parent=5 // pred_fallthru
        _
      %p114 = scmp.lt.s32.totalorder %s15, 2
      // Predicated region
      $region17: #{tpu_custom_call.1} parent=5 // pred_check
        %p115 = pneg %p114
      $region18: #{tpu_custom_call.1} parent=5 // pred_check_branch
        %117 = sbr.rel (%p115) target = $region20
      $region19: #{tpu_custom_call.1} parent=5 // pred_region
        // Predicated region
        $region21: #{tpu_custom_call.1} parent=19 // pred_check
          %p118 = pneg %p35
        $region22: #{tpu_custom_call.1} parent=19 // pred_check_branch
          %120 = sbr.rel (%p118) target = $region24
        $region23: #{tpu_custom_call.1} parent=19 // pred_region
          %s121 = sand.u32 %s25, 1
          %s122 = scalar_lea.sflag [#allocation3], %s121
          %s123 = sand.u32 %s25, 1
          %s124 = smul.addr %s123, 8
          %s125 = scalar_lea.vmem [#allocation2], %s124
          %s127 = ssub.s32 128, 128
          %128 = vsyncadd %s122, %s127
          %s129 = smul.addr %s15, 128
          %s130 = scalar_lea.hbm %s0, %s129
          %s132 = sshll.u32 %s125, 4
          %s133 = int_to_ptr.vmem [resolvable:$true] %s132
          %135 = dma.hbm_to_vmem [thread:$0]  %s130, 128, %s133, %s122
        $region24: #{tpu_custom_call.1} parent=19 // pred_fallthru
          _
      $region20: #{tpu_custom_call.1} parent=5 // pred_fallthru
        _
      %p136 = scmp.le.s32.totalorder 1, %s15
      %p137 = scmp.lt.s32.totalorder %s15, 3
      %p138 = pnand %p136, %p137
      %p139 = pneg %p138
      // Predicated region
      $region25: #{tpu_custom_call.1} parent=5 // pred_check
        _
      $region26: #{tpu_custom_call.1} parent=5 // pred_check_branch
        %141 = sbr.rel (%p138) target = $region28
      $region27: #{tpu_custom_call.1} parent=5 // pred_region
        %s142 = ssub.s32 %s15, 1
        %s143 = sand.u32 %s28, 1
        %s144 = scalar_lea.sflag [#allocation3], %s143
        %s145 = sand.u32 %s28, 1
        %s146 = smul.addr %s145, 8
        %s147 = scalar_lea.vmem [#allocation2], %s146
        // Predicated region
        $region29: #{tpu_custom_call.1} parent=27 // pred_check
          %p148 = pneg %p41
        $region30: #{tpu_custom_call.1} parent=27 // pred_check_branch
          %150 = sbr.rel (%p148) target = $region32
        $region31: #{tpu_custom_call.1} parent=27 // pred_region
          %151 = dma.done %s144, 128
        $region32: #{tpu_custom_call.1} parent=27 // pred_fallthru
          _
        // Predicated region
        $region33: #{tpu_custom_call.1} parent=27 // pred_check
          %p152 = pneg %p62
        $region34: #{tpu_custom_call.1} parent=27 // pred_check_branch
          %154 = sbr.rel (%p152) target = $region36
        $region35: #{tpu_custom_call.1} parent=27 // pred_region
          %155 = dma.done [#allocation6], 16
        $region36: #{tpu_custom_call.1} parent=27 // pred_fallthru
          _
        %s156 = sand.u32 %s28, 1
        %s157 = scalar_lea.sflag [#allocation3], %s156
        %s158 = sand.u32 %s28, 1
        %s159 = smul.addr %s158, 8
        %s160 = scalar_lea.vmem [#allocation2], %s159
        %p161 = pneg %p41
        %p162 = pneg %p38
        %p163 = pneg %p62
        %p164 = pneg %p59
        %p165 = pneg %p88
        %p166 = pneg %p85
        %s167 = sand.u32 %s75, 1
        %s168 = scalar_lea.sflag [#allocation4], %s167
        %s169 = sand.u32 %s75, 1
        %s170 = smul.addr %s169, 8
        %s171 = scalar_lea.vmem [#allocation7], %s170
        %v172 = vld [vmem:[%s147] sm:$0xff]
        %v173 = vmul.f32 %v172, %v172
        %vm174 = vcmask 261120
        %v175 = vsel %vm174, %v173, 0.0
        %176 = vadd.xlane.f32.xlu0 %v175
        %v177 = vpop.xlane.xlu0 %176
        %v178 = vmul.f32 %v177, 0.03125
        %v179 = vadd.f32 %v178, 1e-05
        %v180 = vrsqrt.pop %v179
        %v181 = vld [vmem:[#allocation5] sm:$0x1]
        %v182 = vmul.f32 %v172, %v180
        %v184 = vlaneseq
        %v185 = vshrl.u32 %v184, 7
        %v186 = vsub.s32 0, %v185
        %v187 = vrot.slane %v181, %v186
        %v189 = vmul.f32 %v182, %v187
        %190 = vst.msk [vmem:[%s171] sm:$0xff] %vm174, %v189
        %s191 = sand.u32 %s75, 1
        %s192 = scalar_lea.sflag [#allocation4], %s191
        %s193 = sand.u32 %s75, 1
        %s194 = smul.addr %s193, 8
        %s195 = scalar_lea.vmem [#allocation7], %s194
        // Predicated region
        $region37: #{tpu_custom_call.1} parent=27 // pred_check
          %p196 = pneg %p85
        $region38: #{tpu_custom_call.1} parent=27 // pred_check_branch
          %198 = sbr.rel (%p196) target = $region40
        $region39: #{tpu_custom_call.1} parent=27 // pred_region
          %s200 = ssub.s32 128, 128
          %201 = vsyncadd %s192, %s200
          %s202 = smul.addr %s20, 128
          %s203 = scalar_lea.hbm %s2, %s202
          %s205 = sshll.u32 %s195, 4
          %s206 = int_to_ptr.vmem [resolvable:$true] %s205
          %208 = dma.vmem_to_hbm [thread:$0]  %s206, 128, %s203, %s192
        $region40: #{tpu_custom_call.1} parent=27 // pred_fallthru
          _
      $region28: #{tpu_custom_call.1} parent=5 // pred_fallthru
        _
      %p209 = scmp.le.s32.totalorder 2, %s15
      // Predicated region
      $region41: #{tpu_custom_call.1} parent=5 // pred_check
        %p210 = pneg %p209
      $region42: #{tpu_custom_call.1} parent=5 // pred_check_branch
        %212 = sbr.rel (%p210) target = $region44
      $region43: #{tpu_custom_call.1} parent=5 // pred_region
        %s213 = ssub.s32 %s15, 2
        // Predicated region
        $region45: #{tpu_custom_call.1} parent=43 // pred_check
          %p214 = pneg %p91
        $region46: #{tpu_custom_call.1} parent=43 // pred_check_branch
          %216 = sbr.rel (%p214) target = $region48
        $region47: #{tpu_custom_call.1} parent=43 // pred_region
          %s217 = sand.u32 %s76, 1
          %s218 = scalar_lea.sflag [#allocation4], %s217
          %s219 = sand.u32 %s76, 1
          %s220 = smul.addr %s219, 8
          %s221 = scalar_lea.vmem [#allocation7], %s220
          %222 = dma.done %s218, 128
        $region48: #{tpu_custom_call.1} parent=43 // pred_fallthru
          _
      $region44: #{tpu_custom_call.1} parent=5 // pred_fallthru
        _
    $region6: #{tpu_custom_call.1} parent=1 // loop_footer
      %s19 = sadd.s32 1, %s15
    $region7: #{tpu_custom_call.1} parent=1 // loop_footer_branch
      %14 = sbr.rel target = $region3
    $region8: #{tpu_custom_call.1} parent=1 // loop_exit
      _
    %223 = vsyncpa [#allocation3], 1
    %s224 = scalar_lea.sflag [#allocation3], 1
    %225 = vsyncpa %s224, 1
    %226 = vsyncpa [#allocation6], 1
    %227 = vsyncpa [#allocation4], 1
    %s228 = scalar_lea.sflag [#allocation4], 1
    %229 = vsyncpa %s228, 1

</llo_original>
